<compile_context>
chip_gen: v6e
topology: v6e:2x2x1
jax: 0.10.0
libtpu: 0.0.40
codegen_flags: <defaults>
</compile_context>

<pallas_src>
import jax
import jax.numpy as jnp
from jax.experimental import pallas as pl
from jax.experimental.pallas import tpu as pltpu


def attention_kernel(x_ref, w_ref, ctx_ref, attn_ref):
    # x_ref:    (TB, T, H) block of rnn_output
    # w_ref:    (1, H)     attention projection weight (nn.Linear(H, 1) weight)
    # ctx_ref:  (TB, H)    context vectors for this batch block
    # attn_ref: (TB, T)    attention weights (lane-dense; reshaped in wrapper)
    x = x_ref[...].astype(jnp.float32)          # (TB, T, H)
    w = w_ref[...].astype(jnp.float32)          # (1, H)

    # scores[b, t] = <x[b, t, :], w>  -> VPU multiply + XLU lane reduction.
    scores = jnp.sum(x * w, axis=-1)            # (TB, T)

    # Numerically-stable softmax over the time axis, per batch row.
    m = jnp.max(scores, axis=-1, keepdims=True)        # (TB, 1)
    e = jnp.exp(scores - m)                             # (TB, T)  EUP exp
    denom = jnp.sum(e, axis=-1, keepdims=True)          # (TB, 1)
    inv = pl.reciprocal(denom, approx=True)             # EUP reciprocal
    attn = e * inv                                      # (TB, T)

    # context[b, :] = sum_t attn[b, t] * x[b, t, :]  (VPU mul + sublane reduce)
    ctx = jnp.sum(attn[:, :, None] * x, axis=1)         # (TB, H)

    ctx_ref[...] = ctx.astype(ctx_ref.dtype)
    attn_ref[...] = attn.astype(attn_ref.dtype)


def _choose_batch_block(B, T, H, itemsize, target_bytes=8 << 20):
    """Pick the batch block TB.

    Small batches: one grid step with TB == B (block equals full array dim, so
    no sublane-alignment padding needed).  Large batches: TB is a multiple of
    8, sized so the (TB, T, H) input block stays under `target_bytes`, capped
    so the parallel batch axis has >= 2 grid steps.
    """
    if B <= 8:
        return B
    row_bytes = max(1, T * H * itemsize)
    tb = max(8, (target_bytes // row_bytes) // 8 * 8)
    # keep >= 2 grid steps so megacore / 2-TC chips can split the batch axis
    half = max(8, ((pl.cdiv(B, 2) + 7) // 8) * 8)
    tb = min(tb, half)
    tb = min(tb, ((B + 7) // 8) * 8)
    return int(tb)


def attention_forward(rnn_output, weight):
    """rnn_output: (B, T, H); weight: (1, H) as in nn.Linear(H, 1, bias=False).

    Returns (context_vector (B, H), attn_weights (B, T, 1)) matching PyTorch.
    """
    B, T, H = rnn_output.shape
    itemsize = rnn_output.dtype.itemsize
    TB = _choose_batch_block(B, T, H, itemsize)

    # Pad batch to a multiple of TB (padded rows are computed independently
    # per row and discarded, so they cannot affect real rows).
    nb = pl.cdiv(B, TB)
    Bp = nb * TB
    if Bp != B:
        rnn_output = jnp.pad(rnn_output, ((0, Bp - B), (0, 0), (0, 0)))

    # VMEM budget: double-buffered in/out blocks plus headroom.
    block_bytes = (TB * T * H + TB * H + TB * T + H) * itemsize
    vmem_limit = int(min(128 * 1024 * 1024,
                         max(32 * 1024 * 1024, 6 * block_bytes)))

    cost = pl.CostEstimate(
        flops=4 * Bp * T * H,                    # scores (2*BTH) + context (2*BTH)
        transcendentals=Bp * T,                  # exp
        bytes_accessed=(Bp * T * H + H) * itemsize           # reads
                       + (Bp * H + Bp * T) * itemsize,       # writes
    )

    ctx, attn = pl.pallas_call(
        attention_kernel,
        out_shape=(
            jax.ShapeDtypeStruct((Bp, H), rnn_output.dtype),
            jax.ShapeDtypeStruct((Bp, T), rnn_output.dtype),
        ),
        grid=(nb,),
        in_specs=[
            pl.BlockSpec((TB, T, H), lambda b: (b, 0, 0)),
            pl.BlockSpec((1, H), lambda b: (0, 0)),
        ],
        out_specs=(
            pl.BlockSpec((TB, H), lambda b: (b, 0)),
            pl.BlockSpec((TB, T), lambda b: (b, 0)),
        ),
        compiler_params=pltpu.CompilerParams(
            dimension_semantics=("parallel",),
            vmem_limit_bytes=vmem_limit,
        ),
        cost_estimate=cost,
    )(rnn_output, weight)

    context_vector = ctx[:B]
    attn_weights = attn[:B].reshape(B, T, 1)   # match PyTorch output shape
    return context_vector, attn_weights


if __name__ == "__main__":
    B, T, H = 2, 8, 32  # batch, seq_len, hidden_size

    key = jax.random.PRNGKey(0)
    k_x, k_w = jax.random.split(key)

    rnn_output = jax.random.normal(k_x, (B, T, H), dtype=jnp.float32)
    # deterministic init matching nn.Linear(H, 1, bias=False) weight shape (1, H)
    bound = 1.0 / jnp.sqrt(H)
    weight = jax.random.uniform(k_w, (1, H), dtype=jnp.float32,
                                minval=-bound, maxval=bound)

    context_vector, attn_weights = attention_forward(rnn_output, weight)
    context_vector = jax.block_until_ready(context_vector)
    attn_weights = jax.block_until_ready(attn_weights)

    # pure-JAX reference for a sanity check
    scores_ref = jnp.einsum("bth,oh->bto", rnn_output, weight)
    attn_ref = jax.nn.softmax(scores_ref, axis=1)
    ctx_ref = jnp.sum(attn_ref * rnn_output, axis=1)

    assert context_vector.shape == (B, H)
    assert attn_weights.shape == (B, T, 1)
    # Tolerance accounts for the EUP approximate reciprocal in the softmax.
    assert jnp.allclose(context_vector, ctx_ref, atol=2e-3, rtol=2e-3)
    assert jnp.allclose(attn_weights, attn_ref, atol=2e-3, rtol=2e-3)

    print("KERNEL_OK")
</pallas_src>

<mosaic_0001>
module attributes {stable_mosaic.version = 11 : i64} {
  func.func @attention_kernel(%arg0: i32, %arg1: memref<2x8x32xf32, #tpu.memory_space<vmem>>, %arg2: memref<1x32xf32, #tpu.memory_space<vmem>>, %arg3: memref<2x32xf32, #tpu.memory_space<vmem>>, %arg4: memref<2x8xf32, #tpu.memory_space<vmem>>) attributes {dimension_semantics = [#tpu.dimension_semantics<parallel>], iteration_bounds = array<i64: 1>, scalar_prefetch = 0 : i64, scratch_operands = 0 : i64, tpu.core_type = #tpu.core_type<tc>, window_params = [{transform_indices = @transform_0, window_bounds = array<i64: 2, 8, 32>}, {pipeline_mode = #tpu.pipeline_mode<synchronous>, transform_indices = @transform_1, window_bounds = array<i64: 1, 32>}, {transform_indices = @transform_2, window_bounds = array<i64: 2, 32>}, {transform_indices = @transform_3, window_bounds = array<i64: 2, 8>}]} {
    %c0 = arith.constant 0 : index
    %c0_0 = arith.constant 0 : index
    %c0_1 = arith.constant 0 : index
    %0 = vector.load %arg1[%c0, %c0_0, %c0_1] : memref<2x8x32xf32, #tpu.memory_space<vmem>>, vector<2x8x32xf32>
    %c0_2 = arith.constant 0 : index
    %c0_3 = arith.constant 0 : index
    %1 = vector.load %arg2[%c0_2, %c0_3] : memref<1x32xf32, #tpu.memory_space<vmem>>, vector<1x32xf32>
    %2 = vector.shape_cast %1 : vector<1x32xf32> to vector<1x1x32xf32>
    %3 = vector.broadcast %2 : vector<1x1x32xf32> to vector<2x8x32xf32>
    %4 = arith.mulf %0, %3 : vector<2x8x32xf32>
    %cst = arith.constant dense<0.000000e+00> : vector<2x8xf32>
    %5 = vector.multi_reduction <add>, %4, %cst [2] : vector<2x8x32xf32> to vector<2x8xf32>
    %cst_4 = arith.constant dense<0xFF800000> : vector<2xf32>
    %6 = vector.multi_reduction <maximumf>, %5, %cst_4 [1] : vector<2x8xf32> to vector<2xf32>
    %7 = vector.shape_cast %6 : vector<2xf32> to vector<2x1xf32>
    %8 = vector.broadcast %7 : vector<2x1xf32> to vector<2x8xf32>
    %9 = arith.subf %5, %8 : vector<2x8xf32>
    %10 = math.exp %9 : vector<2x8xf32>
    %cst_5 = arith.constant dense<0.000000e+00> : vector<2xf32>
    %11 = vector.multi_reduction <add>, %10, %cst_5 [1] : vector<2x8xf32> to vector<2xf32>
    %12 = vector.shape_cast %11 : vector<2xf32> to vector<2x1xf32>
    %13 = tpu.reciprocal %12 {approx = true} : vector<2x1xf32> -> vector<2x1xf32>
    %14 = vector.broadcast %13 : vector<2x1xf32> to vector<2x8xf32>
    %15 = arith.mulf %10, %14 : vector<2x8xf32>
    %16 = vector.shape_cast %15 : vector<2x8xf32> to vector<2x8x1xf32>
    %17 = vector.broadcast %16 : vector<2x8x1xf32> to vector<2x8x32xf32>
    %18 = arith.mulf %17, %0 : vector<2x8x32xf32>
    %cst_6 = arith.constant dense<0.000000e+00> : vector<2x32xf32>
    %19 = vector.multi_reduction <add>, %18, %cst_6 [1] : vector<2x8x32xf32> to vector<2x32xf32>
    %c0_7 = arith.constant 0 : index
    %c0_8 = arith.constant 0 : index
    %20 = vector.load %arg3[%c0_7, %c0_8] : memref<2x32xf32, #tpu.memory_space<vmem>>, vector<2x32xf32>
    tpu.vector_store %arg3[%c0_7, %c0_8], %19 {strides = array<i32>} : memref<2x32xf32, #tpu.memory_space<vmem>>, vector<2x32xf32>,
    %c0_9 = arith.constant 0 : index
    %c0_10 = arith.constant 0 : index
    %21 = vector.load %arg4[%c0_9, %c0_10] : memref<2x8xf32, #tpu.memory_space<vmem>>, vector<2x8xf32>
    tpu.vector_store %arg4[%c0_9, %c0_10], %15 {strides = array<i32>} : memref<2x8xf32, #tpu.memory_space<vmem>>, vector<2x8xf32>,
    return
  }
  func.func @transform_0(%arg0: i32) -> (i32, i32, i32) {
    %c0_i32 = arith.constant 0 : i32
    %c0_i32_0 = arith.constant 0 : i32
    %c0_i32_1 = arith.constant 0 : i32
    return %arg0, %c0_i32, %c0_i32_0 : i32, i32, i32
  }
  func.func @transform_1(%arg0: i32) -> (i32, i32) {
    %c0_i32 = arith.constant 0 : i32
    %c0_i32_0 = arith.constant 0 : i32
    %c0_i32_1 = arith.constant 0 : i32
    return %c0_i32, %c0_i32_0 : i32, i32
  }
  func.func @transform_2(%arg0: i32) -> (i32, i32) {
    %c0_i32 = arith.constant 0 : i32
    %c0_i32_0 = arith.constant 0 : i32
    return %arg0, %c0_i32 : i32, i32
  }
  func.func @transform_3(%arg0: i32) -> (i32, i32) {
    %c0_i32 = arith.constant 0 : i32
    %c0_i32_0 = arith.constant 0 : i32
    return %arg0, %c0_i32 : i32, i32
  }
}

</mosaic_0001>

<llo_original>
// kernel: tpu_custom_call.1
$region0: #{tpu_custom_call.1}
  #allocation0 [shape = 'u32[]', space=smem, size = 0x4, offset = 0x4, fixed_abs, tag = 'smem constant byte address 0x4 - core index']
  #allocation1 [shape = 'u32[144,128]{1,0:T(1,128)}', space=vmem, size = 0x12000, scoped, tag = 'internal scratch']
  %s0 = inlined_call_operand.hbm [shape: f32[2,8,32], index: 0, kind: input, shape index: {}]
  %s1 = inlined_call_operand.vmem [shape: f32[1,32], index: 1, kind: input, shape index: {}]
  %s2 = inlined_call_operand.hbm [shape: f32[2,32], index: 2, kind: output, shape index: {0}]
  %s3 = inlined_call_operand.hbm [shape: f32[2,8], index: 3, kind: output, shape index: {1}]
  %4 = xla_tuple %s2, %s3
  %s5 = sld [smem:[#allocation0]]
  $region30: #{tpu_custom_call.1} parent=0
    _
  %s7 = ssub.s32 1, %s5
  %s8 = scalar_select 0, %s7, %s5
  $region1: #{tpu_custom_call.1} parent=0
    #allocation2 [shape = 'u8[8192]{0}', space=vmem, size = 0x2000, scoped, tag = 'input window, operand 0, single buffered']
    #allocation3 [shape = 's32[1]{0}', space=sflag, size = 0x4, scoped, tag = 'scoped memory for tpu_custom_call.1']
    #allocation4 [shape = 's32[1]{0}', space=sflag, size = 0x4, scoped, tag = 'scoped memory for tpu_custom_call.1']
    #allocation5 [shape = 'u8[1024]{0}', space=vmem, size = 0x400, scoped, tag = 'output window, operand 0, single buffered']
    #allocation6 [shape = 'u8[1024]{0}', space=vmem, size = 0x400, scoped, tag = 'output window, operand 1, single buffered']
    #allocation7 [shape = 's32[1]{0}', space=sflag, size = 0x4, scoped, tag = 'scoped memory for tpu_custom_call.1']
    %9 = vsyncpa [#allocation3], 0
    %10 = vsyncpa [#allocation4], 0
    %11 = vsyncpa [#allocation7], 0
    // Predicated region
    $region2: #{tpu_custom_call.1} parent=1 // pred_check
      _
    $region3: #{tpu_custom_call.1} parent=1 // pred_check_branch
      %13 = sbr.rel (0) target = $region5
    $region4: #{tpu_custom_call.1} parent=1 // pred_region
      %s15 = ssub.s32 256, 256
      %16 = vsyncadd [#allocation3], %s15
      %s17 = sshll.u32 [#allocation2], 4
      %s18 = int_to_ptr.vmem [resolvable:$true] %s17
      %23 = dma.hbm_to_vmem [thread:$0]  %s0, 256, %s18, [#allocation3], 128, 128, 8
    $region5: #{tpu_custom_call.1} parent=1 // pred_fallthru
      _
    // Predicated region
    $region6: #{tpu_custom_call.1} parent=1 // pred_check
      _
    $region7: #{tpu_custom_call.1} parent=1 // pred_check_branch
      %25 = sbr.rel (0) target = $region9
    $region8: #{tpu_custom_call.1} parent=1 // pred_region
      _
    $region9: #{tpu_custom_call.1} parent=1 // pred_fallthru
      _
    // Predicated region
    $region10: #{tpu_custom_call.1} parent=1 // pred_check
      _
    $region11: #{tpu_custom_call.1} parent=1 // pred_check_branch
      %27 = sbr.rel (0) target = $region13
    $region12: #{tpu_custom_call.1} parent=1 // pred_region
      %28 = dma.done [#allocation3], 256
    $region13: #{tpu_custom_call.1} parent=1 // pred_fallthru
      _
    %v29 = vld [vmem:[#allocation2] sm:$0xff]
    %v30 = vld [vmem:[#allocation2 + $0x8] sm:$0xff]
    %v31 = vld [vmem:[%s1] sm:$0x1]
    %v33 = vlaneseq
    %v34 = vshrl.u32 %v33, 7
    %v35 = vsub.s32 0, %v34
    %v36 = vrot.slane %v31, %v35
    %v38 = vmul.f32 %v29, %v36
    %v39 = vmul.f32 %v30, %v36
    %vm40 = vcmask 261120
    %v41 = vsel %vm40, %v38, 0.0
    %42 = vadd.xlane.f32.xlu0 %v41
    %v43 = vpop.xlane.xlu0 %42
    %v44 = vsel %vm40, %v39, 0.0
    %45 = vadd.xlane.f32.xlu0 %v44
    %v46 = vpop.xlane.xlu0 %45
    %v49 = vlaneseq
    %v50 = vand.u32 %v49, 127
    %v51 = vlaneseq
    %v52 = vshrl.u32 %v51, 7
    %v53 = vsub.s32 %v50, %v52
    %v54 = vrot.slane %v43, %v53
    %v55 = vlaneseq
    %v56 = vshrl.u32 %v55, 7
    %v57 = vsub.s32 %v50, %v56
    %v58 = vrot.slane %v46, %v57
    %vm59 = vcmask 1041409
    %v60 = vsel %vm59, %v58, %v54
    %vm62 = vcmask 58368
    %v63 = vsel %vm62, %v60, -inf
    %64 = vmax.xlane.f32.xlu0 %v63
    %v65 = vpop.xlane.xlu0 %64
    %v67 = vlaneseq
    %v68 = vshrl.u32 %v67, 7
    %v69 = vsub.s32 0, %v68
    %v70 = vrot.slane %v65, %v69
    %v71 = vlaneseq
    %v72 = vshrl.u32 %v71, 7
    %v73 = vsub.s32 1, %v72
    %v74 = vrot.slane %v65, %v73
    %v77 = vsub.f32 %v43, %v70
    %v78 = vsub.f32 %v46, %v74
    %v79 = vmul.f32 %v77, 1.442695
    %v80 = vpow.pop %v79
    %v81 = vmul.f32 %v78, 1.442695
    %v82 = vpow.pop %v81
    %85 = vset.pattern.permute.xlu0 0
    %86 = vperm.xlu0 %85, %v80
    %v87 = vpop.permute.xlu0 %86
    %88 = vset.pattern.permute.xlu0 0
    %89 = vperm.xlu0 %88, %v82
    %v90 = vpop.permute.xlu0 %89
    %v91 = vlaneseq
    %v92 = vshrl.u32 %v91, 7
    %v93 = vsub.s32 %v50, %v92
    %v94 = vrot.slane %v87, %v93
    %v95 = vlaneseq
    %v96 = vshrl.u32 %v95, 7
    %v97 = vsub.s32 %v50, %v96
    %v98 = vrot.slane %v90, %v97
    %v99 = vsel %vm59, %v98, %v94
    %v101 = vsel %vm62, %v99, 0.0
    %102 = vadd.xlane.f32.xlu0 %v101
    %v103 = vpop.xlane.xlu0 %102
    %v104 = vrcp.pop %v103
    %v106 = vlaneseq
    %v107 = vshrl.u32 %v106, 7
    %v108 = vsub.s32 0, %v107
    %v109 = vrot.slane %v104, %v108
    %v110 = vlaneseq
    %v111 = vshrl.u32 %v110, 7
    %v112 = vsub.s32 1, %v111
    %v113 = vrot.slane %v104, %v112
    %v116 = vmul.f32 %v80, %v109
    %v117 = vmul.f32 %v82, %v113
    %119 = vset.pattern.permute.xlu0 0
    %120 = vperm.xlu0 %119, %v116
    %v121 = vpop.permute.xlu0 %120
    %124 = vset.pattern.permute.xlu0 0
    %125 = vperm.xlu0 %124, %v117
    %v126 = vpop.permute.xlu0 %125
    %v128 = vmul.f32 %v121, %v29
    %v129 = vmul.f32 %v126, %v30
    %v130 = vsel %vm40, %v128, 0.0
    %v131 = vrot.slane %v130, 4
    %v132 = vadd.f32 %v130, %v131
    %v133 = vrot.slane %v132, 2
    %v134 = vadd.f32 %v132, %v133
    %v135 = vrot.slane %v134, 1
    %v136 = vadd.f32 %v134, %v135
    %v137 = vsel %vm40, %v129, 0.0
    %v138 = vrot.slane %v137, 4
    %v139 = vadd.f32 %v137, %v138
    %v140 = vrot.slane %v139, 2
    %v141 = vadd.f32 %v139, %v140
    %v142 = vrot.slane %v141, 1
    %v143 = vadd.f32 %v141, %v142
    %v146 = vsel %vm59, %v143, %v136
    %vm148 = vcmask 254976
    %149 = vst.msk [vmem:[#allocation5] sm:$0x3] %vm148, %v146
    %v150 = vlaneseq
    %v151 = vshrl.u32 %v150, 7
    %v152 = vsub.s32 %v50, %v151
    %v153 = vrot.slane %v121, %v152
    %v154 = vlaneseq
    %v155 = vshrl.u32 %v154, 7
    %v156 = vsub.s32 %v50, %v155
    %v157 = vrot.slane %v126, %v156
    %v158 = vsel %vm59, %v157, %v153
    %160 = vst.msk [vmem:[#allocation6] sm:$0x3] %vm62, %v158
    // Predicated region
    $region14: #{tpu_custom_call.1} parent=1 // pred_check
      _
    $region15: #{tpu_custom_call.1} parent=1 // pred_check_branch
      %162 = sbr.rel (0) target = $region17
    $region16: #{tpu_custom_call.1} parent=1 // pred_region
      %s164 = ssub.s32 32, 32
      %165 = vsyncadd [#allocation4], %s164
      %s167 = sshll.u32 [#allocation5], 4
      %s168 = int_to_ptr.vmem [resolvable:$true] %s167
      %170 = dma.vmem_to_hbm [thread:$0]  %s168, 32, %s2, [#allocation4]
    $region17: #{tpu_custom_call.1} parent=1 // pred_fallthru
      _
    // Predicated region
    $region18: #{tpu_custom_call.1} parent=1 // pred_check
      _
    $region19: #{tpu_custom_call.1} parent=1 // pred_check_branch
      %172 = sbr.rel (0) target = $region21
    $region20: #{tpu_custom_call.1} parent=1 // pred_region
      %s174 = ssub.s32 32, 32
      %175 = vsyncadd [#allocation7], %s174
      %s177 = sshll.u32 [#allocation6], 4
      %s178 = int_to_ptr.vmem [resolvable:$true] %s177
      %180 = dma.vmem_to_hbm [thread:$0]  %s178, 32, %s3, [#allocation7]
    $region21: #{tpu_custom_call.1} parent=1 // pred_fallthru
      _
    // Predicated region
    $region22: #{tpu_custom_call.1} parent=1 // pred_check
      _
    $region23: #{tpu_custom_call.1} parent=1 // pred_check_branch
      %182 = sbr.rel (0) target = $region25
    $region24: #{tpu_custom_call.1} parent=1 // pred_region
      %183 = dma.done [#allocation4], 32
    $region25: #{tpu_custom_call.1} parent=1 // pred_fallthru
      _
    // Predicated region
    $region26: #{tpu_custom_call.1} parent=1 // pred_check
      _
    $region27: #{tpu_custom_call.1} parent=1 // pred_check_branch
      %185 = sbr.rel (0) target = $region29
    $region28: #{tpu_custom_call.1} parent=1 // pred_region
      %186 = dma.done [#allocation7], 32
    $region29: #{tpu_custom_call.1} parent=1 // pred_fallthru
      _
    %187 = vsyncpa [#allocation3], 1
    %188 = vsyncpa [#allocation4], 1
    %189 = vsyncpa [#allocation7], 1

</llo_original>
